<compile_context>
chip_gen: v7x
topology: tpu7x:2x2x1
jax: 0.10.0
libtpu: 0.0.40
codegen_flags: <defaults>
</compile_context>

<pallas_src>
from functools import partial

import jax
import jax.numpy as jnp
from jax import lax
from jax.experimental import pallas as pl
from jax.experimental.pallas import tpu as pltpu


def _round_up(x, m):
    return ((x + m - 1) // m) * m


def _slab_layout(in_size, hidden, out_size):
    """Row offsets of the packed parameter slab (all rows are 4H lanes wide)."""
    r_whh = 0                       # (hidden) rows : hidden->hidden weights, gate-packed
    r_wih = r_whh + hidden          # (in_size) rows: input->hidden weights, gate-packed
    r_b = r_wih + in_size           # 1 row        : fused bias b_ih + b_hh
    r_wlin = r_b + 1                # (out_size)   : final Linear weight (first H lanes)
    r_blin = r_wlin + out_size      # 1 row        : final Linear bias (first OUT lanes)
    r_scale = r_blin + 1            # 1 row        : activation pre/post scale (0.5 / 1.0)
    r_offset = r_scale + 1          # 1 row        : activation offset (0.5 / 0.0)
    rows = _round_up(r_offset + 1, 8)
    return dict(r_whh=r_whh, r_wih=r_wih, r_b=r_b, r_wlin=r_wlin,
                r_blin=r_blin, r_scale=r_scale, r_offset=r_offset, rows=rows)


def pack_lstm_params(w_ih, w_hh, b_ih, b_hh, w_lin, b_lin):
    """One-time host-side packing of all static parameters into a single slab.

    Gate columns follow PyTorch's (i, f, g, o) stacking: lanes [kH, (k+1)H).
    """
    four_h, in_size = w_ih.shape
    hidden = four_h // 4
    out_size = w_lin.shape[0]
    assert hidden <= four_h and out_size <= four_h
    L = _slab_layout(in_size, hidden, out_size)

    lane = jnp.arange(four_h)
    is_g = (lane >= 2 * hidden) & (lane < 3 * hidden)
    # sigmoid(x) = 0.5 * tanh(0.5 * x) + 0.5 on i/f/o lanes; plain tanh on g lanes.
    scale_row = jnp.where(is_g, 1.0, 0.5).astype(jnp.float32)
    offset_row = jnp.where(is_g, 0.0, 0.5).astype(jnp.float32)

    slab = jnp.zeros((L["rows"], four_h), jnp.float32)
    slab = slab.at[L["r_whh"]:L["r_whh"] + hidden, :].set(w_hh.T.astype(jnp.float32))
    slab = slab.at[L["r_wih"]:L["r_wih"] + in_size, :].set(w_ih.T.astype(jnp.float32))
    slab = slab.at[L["r_b"], :].set((b_ih + b_hh).astype(jnp.float32))
    slab = slab.at[L["r_wlin"]:L["r_wlin"] + out_size, 0:hidden].set(
        w_lin.astype(jnp.float32))
    slab = slab.at[L["r_blin"], 0:out_size].set(b_lin.astype(jnp.float32))
    slab = slab.at[L["r_scale"], :].set(scale_row)
    slab = slab.at[L["r_offset"], :].set(offset_row)
    return slab


def make_lstm_kernel(seq_len, in_size, hidden, out_size):
    four_h = 4 * hidden
    L = _slab_layout(in_size, hidden, out_size)

    def kernel(x_ref, p_ref, out_ref):
        # --- hoist all parameters into vregs (static slices of one VMEM slab) ---
        whh = p_ref[L["r_whh"]:L["r_whh"] + hidden, :]          # (H, 4H)
        wih = p_ref[L["r_wih"]:L["r_wih"] + in_size, :]         # (IN, 4H)
        b = p_ref[L["r_b"]:L["r_b"] + 1, :]                     # (1, 4H)
        scale = p_ref[L["r_scale"]:L["r_scale"] + 1, :]         # (1, 4H)
        offset = p_ref[L["r_offset"]:L["r_offset"] + 1, :]      # (1, 4H)

        x = x_ref[...]                                          # (SEQ, IN)

        # Input->hidden projection for ALL timesteps, fused bias.
        if in_size <= 4:
            # Tiny IN (module default IN=1): VPU broadcast multiply — avoids a
            # latency-heavy, mostly-zero-K MXU matmul in the prologue.
            xp = x[:, 0:1] * wih[0:1, :] + b                    # (SEQ, 4H)
            for k in range(1, in_size):
                xp = xp + x[:, k:k + 1] * wih[k:k + 1, :]
        else:
            xp = jnp.dot(x, wih, preferred_element_type=jnp.float32) + b

        h = jnp.zeros((1, hidden), jnp.float32)
        c = jnp.zeros((1, hidden), jnp.float32)

        # Statically unrolled recurrence: (h, c) live in vregs, static row slices
        # of xp, one MXU push + two EUP (tanh) pushes per timestep.
        for t in range(seq_len):
            gates = xp[t:t + 1, :] + jnp.dot(
                h, whh, preferred_element_type=jnp.float32)     # (1, 4H)
            # sigmoid via single tanh on the full vreg (scale/offset are lane masks)
            act = jnp.tanh(gates * scale) * scale + offset
            i_g = act[:, 0 * hidden:1 * hidden]
            f_g = act[:, 1 * hidden:2 * hidden]
            g_g = act[:, 2 * hidden:3 * hidden]
            o_g = act[:, 3 * hidden:4 * hidden]
            c = f_g * c + i_g * g_g
            h = o_g * jnp.tanh(c)

        # Final Linear as VPU multiply + lane reduce (no tiny MXU push at the tail).
        wlin = p_ref[L["r_wlin"]:L["r_wlin"] + out_size, 0:hidden]   # (OUT, H)
        blin = p_ref[L["r_blin"]:L["r_blin"] + 1, 0:out_size]        # (1, OUT)
        out_ref[...] = jnp.sum(h * wlin, axis=-1)[None, :] + blin

    return kernel


@partial(jax.jit, static_argnames=("hidden", "out_size"))
def lstm_forward(input_seq, params_slab, *, hidden, out_size):
    """Equivalent of LSTM.forward(input_seq) with zero-initialized hidden_cell.

    input_seq: (seq_len, 1, input_size) float32; params_slab from pack_lstm_params.
    Returns predictions[-1], shape (output_size,).
    """
    seq_len, batch, in_size = input_seq.shape
    assert batch == 1, "module's hidden_cell implies batch == 1"
    x = input_seq[:, 0, :].astype(jnp.float32)                  # (SEQ, IN)

    kernel = make_lstm_kernel(seq_len, in_size, hidden, out_size)
    vmem = pl.BlockSpec(memory_space=pltpu.MemorySpace.VMEM)

    out = pl.pallas_call(
        kernel,
        out_shape=jax.ShapeDtypeStruct((1, out_size), jnp.float32),
        in_specs=[vmem, vmem],
        out_specs=vmem,
    )(x, params_slab)
    return out[0]


def lstm_reference(input_seq, w_ih, w_hh, b_ih, b_hh, w_lin, b_lin):
    """Pure-JAX reference of the PyTorch forward (zero initial hidden_cell)."""
    seq_len, batch, _ = input_seq.shape
    hidden = w_hh.shape[1]

    def step(carry, x_t):
        h, c = carry
        gates = x_t @ w_ih.T + b_ih + h @ w_hh.T + b_hh
        i, f, g, o = jnp.split(gates, 4, axis=-1)
        i, f, o = jax.nn.sigmoid(i), jax.nn.sigmoid(f), jax.nn.sigmoid(o)
        g = jnp.tanh(g)
        c = f * c + i * g
        h = o * jnp.tanh(c)
        return (h, c), h

    init = (jnp.zeros((batch, hidden), jnp.float32),
            jnp.zeros((batch, hidden), jnp.float32))
    _, hs = lax.scan(step, init, input_seq)
    preds = hs.reshape(seq_len, hidden) @ w_lin.T + b_lin
    return preds[-1]


if __name__ == "__main__":
    # Small shapes consistent with the module: input_size=1, hidden=32, output=1.
    SEQ, IN, HID, OUT = 8, 1, 32, 1

    key = jax.random.PRNGKey(0)
    ks = jax.random.split(key, 7)
    scale = 1.0 / jnp.sqrt(HID)
    input_seq = jax.random.normal(ks[0], (SEQ, 1, IN), jnp.float32)
    w_ih = jax.random.uniform(ks[1], (4 * HID, IN), jnp.float32, -scale, scale)
    w_hh = jax.random.uniform(ks[2], (4 * HID, HID), jnp.float32, -scale, scale)
    b_ih = jax.random.uniform(ks[3], (4 * HID,), jnp.float32, -scale, scale)
    b_hh = jax.random.uniform(ks[4], (4 * HID,), jnp.float32, -scale, scale)
    w_lin = jax.random.uniform(ks[5], (OUT, HID), jnp.float32, -scale, scale)
    b_lin = jax.random.uniform(ks[6], (OUT,), jnp.float32, -scale, scale)

    # One-time parameter packing (weights are static) — outside the per-call path.
    params_slab = pack_lstm_params(w_ih, w_hh, b_ih, b_hh, w_lin, b_lin)

    pred = lstm_forward(input_seq, params_slab, hidden=HID, out_size=OUT)
    pred = jax.block_until_ready(pred)

    ref = lstm_reference(input_seq, w_ih, w_hh, b_ih, b_hh, w_lin, b_lin)
    assert pred.shape == (OUT,)
    assert jnp.allclose(pred, ref, rtol=1e-4, atol=1e-4), (pred, ref)

    print("KERNEL_OK")
</pallas_src>

<mosaic_0001>
module attributes {stable_mosaic.version = 11 : i64} {
  func.func @kernel(%arg0: memref<8x1xf32, #tpu.memory_space<vmem>>, %arg1: memref<40x128xf32, #tpu.memory_space<vmem>>, %arg2: memref<1x1xf32, #tpu.memory_space<vmem>>) attributes {dimension_semantics = [], scalar_prefetch = 0 : i64, scratch_operands = 0 : i64, tpu.core_type = #tpu.core_type<tc>} {
    %c0 = arith.constant 0 : index
    %c0_0 = arith.constant 0 : index
    %0 = vector.load %arg1[%c0, %c0_0] : memref<40x128xf32, #tpu.memory_space<vmem>>, vector<32x128xf32>
    %c32 = arith.constant 32 : index
    %c0_1 = arith.constant 0 : index
    %1 = vector.load %arg1[%c32, %c0_1] : memref<40x128xf32, #tpu.memory_space<vmem>>, vector<1x128xf32>
    %c33 = arith.constant 33 : index
    %c0_2 = arith.constant 0 : index
    %2 = vector.load %arg1[%c33, %c0_2] : memref<40x128xf32, #tpu.memory_space<vmem>>, vector<1x128xf32>
    %c36 = arith.constant 36 : index
    %c0_3 = arith.constant 0 : index
    %3 = vector.load %arg1[%c36, %c0_3] : memref<40x128xf32, #tpu.memory_space<vmem>>, vector<1x128xf32>
    %c37 = arith.constant 37 : index
    %c0_4 = arith.constant 0 : index
    %4 = vector.load %arg1[%c37, %c0_4] : memref<40x128xf32, #tpu.memory_space<vmem>>, vector<1x128xf32>
    %c0_5 = arith.constant 0 : index
    %c0_6 = arith.constant 0 : index
    %5 = vector.load %arg0[%c0_5, %c0_6] : memref<8x1xf32, #tpu.memory_space<vmem>>, vector<8x1xf32>
    %6 = vector.broadcast %5 : vector<8x1xf32> to vector<8x128xf32>
    %7 = vector.broadcast %1 : vector<1x128xf32> to vector<8x128xf32>
    %8 = arith.mulf %6, %7 : vector<8x128xf32>
    %9 = vector.broadcast %2 : vector<1x128xf32> to vector<8x128xf32>
    %10 = arith.addf %8, %9 : vector<8x128xf32>
    %cst = arith.constant 0.000000e+00 : f32
    %11 = vector.broadcast %cst : f32 to vector<1x32xf32>
    %cst_7 = arith.constant 0.000000e+00 : f32
    %12 = vector.broadcast %cst_7 : f32 to vector<1x32xf32>
    %13 = vector.extract_strided_slice %10 {offsets = [0, 0], sizes = [1, 128], strides = [1, 1]} : vector<8x128xf32> to vector<1x128xf32>
    %cst_8 = arith.constant dense<0.000000e+00> : vector<1x128xf32>
    %14 = tpu.matmul %11, %0, %cst_8 {dimension_numbers = #tpu.dot_dimension_numbers<[1], [0], [0], [1], [0, 0, 1, 1], [], []>} : vector<1x32xf32>, vector<32x128xf32>, vector<1x128xf32> -> vector<1x128xf32>
    %15 = arith.addf %13, %14 : vector<1x128xf32>
    %16 = arith.mulf %15, %3 : vector<1x128xf32>
    %17 = math.tanh %16 : vector<1x128xf32>
    %18 = arith.mulf %17, %3 : vector<1x128xf32>
    %19 = arith.addf %18, %4 : vector<1x128xf32>
    %20 = vector.extract_strided_slice %19 {offsets = [0, 0], sizes = [1, 32], strides = [1, 1]} : vector<1x128xf32> to vector<1x32xf32>
    %21 = vector.extract_strided_slice %19 {offsets = [0, 32], sizes = [1, 32], strides = [1, 1]} : vector<1x128xf32> to vector<1x32xf32>
    %22 = vector.extract_strided_slice %19 {offsets = [0, 64], sizes = [1, 32], strides = [1, 1]} : vector<1x128xf32> to vector<1x32xf32>
    %23 = vector.extract_strided_slice %19 {offsets = [0, 96], sizes = [1, 32], strides = [1, 1]} : vector<1x128xf32> to vector<1x32xf32>
    %24 = arith.mulf %21, %12 : vector<1x32xf32>
    %25 = arith.mulf %20, %22 : vector<1x32xf32>
    %26 = arith.addf %24, %25 : vector<1x32xf32>
    %27 = math.tanh %26 : vector<1x32xf32>
    %28 = arith.mulf %23, %27 : vector<1x32xf32>
    %29 = vector.extract_strided_slice %10 {offsets = [1, 0], sizes = [1, 128], strides = [1, 1]} : vector<8x128xf32> to vector<1x128xf32>
    %cst_9 = arith.constant dense<0.000000e+00> : vector<1x128xf32>
    %30 = tpu.matmul %28, %0, %cst_9 {dimension_numbers = #tpu.dot_dimension_numbers<[1], [0], [0], [1], [0, 0, 1, 1], [], []>} : vector<1x32xf32>, vector<32x128xf32>, vector<1x128xf32> -> vector<1x128xf32>
    %31 = arith.addf %29, %30 : vector<1x128xf32>
    %32 = arith.mulf %31, %3 : vector<1x128xf32>
    %33 = math.tanh %32 : vector<1x128xf32>
    %34 = arith.mulf %33, %3 : vector<1x128xf32>
    %35 = arith.addf %34, %4 : vector<1x128xf32>
    %36 = vector.extract_strided_slice %35 {offsets = [0, 0], sizes = [1, 32], strides = [1, 1]} : vector<1x128xf32> to vector<1x32xf32>
    %37 = vector.extract_strided_slice %35 {offsets = [0, 32], sizes = [1, 32], strides = [1, 1]} : vector<1x128xf32> to vector<1x32xf32>
    %38 = vector.extract_strided_slice %35 {offsets = [0, 64], sizes = [1, 32], strides = [1, 1]} : vector<1x128xf32> to vector<1x32xf32>
    %39 = vector.extract_strided_slice %35 {offsets = [0, 96], sizes = [1, 32], strides = [1, 1]} : vector<1x128xf32> to vector<1x32xf32>
    %40 = arith.mulf %37, %26 : vector<1x32xf32>
    %41 = arith.mulf %36, %38 : vector<1x32xf32>
    %42 = arith.addf %40, %41 : vector<1x32xf32>
    %43 = math.tanh %42 : vector<1x32xf32>
    %44 = arith.mulf %39, %43 : vector<1x32xf32>
    %45 = vector.extract_strided_slice %10 {offsets = [2, 0], sizes = [1, 128], strides = [1, 1]} : vector<8x128xf32> to vector<1x128xf32>
    %cst_10 = arith.constant dense<0.000000e+00> : vector<1x128xf32>
    %46 = tpu.matmul %44, %0, %cst_10 {dimension_numbers = #tpu.dot_dimension_numbers<[1], [0], [0], [1], [0, 0, 1, 1], [], []>} : vector<1x32xf32>, vector<32x128xf32>, vector<1x128xf32> -> vector<1x128xf32>
    %47 = arith.addf %45, %46 : vector<1x128xf32>
    %48 = arith.mulf %47, %3 : vector<1x128xf32>
    %49 = math.tanh %48 : vector<1x128xf32>
    %50 = arith.mulf %49, %3 : vector<1x128xf32>
    %51 = arith.addf %50, %4 : vector<1x128xf32>
    %52 = vector.extract_strided_slice %51 {offsets = [0, 0], sizes = [1, 32], strides = [1, 1]} : vector<1x128xf32> to vector<1x32xf32>
    %53 = vector.extract_strided_slice %51 {offsets = [0, 32], sizes = [1, 32], strides = [1, 1]} : vector<1x128xf32> to vector<1x32xf32>
    %54 = vector.extract_strided_slice %51 {offsets = [0, 64], sizes = [1, 32], strides = [1, 1]} : vector<1x128xf32> to vector<1x32xf32>
    %55 = vector.extract_strided_slice %51 {offsets = [0, 96], sizes = [1, 32], strides = [1, 1]} : vector<1x128xf32> to vector<1x32xf32>
    %56 = arith.mulf %53, %42 : vector<1x32xf32>
    %57 = arith.mulf %52, %54 : vector<1x32xf32>
    %58 = arith.addf %56, %57 : vector<1x32xf32>
    %59 = math.tanh %58 : vector<1x32xf32>
    %60 = arith.mulf %55, %59 : vector<1x32xf32>
    %61 = vector.extract_strided_slice %10 {offsets = [3, 0], sizes = [1, 128], strides = [1, 1]} : vector<8x128xf32> to vector<1x128xf32>
    %cst_11 = arith.constant dense<0.000000e+00> : vector<1x128xf32>
    %62 = tpu.matmul %60, %0, %cst_11 {dimension_numbers = #tpu.dot_dimension_numbers<[1], [0], [0], [1], [0, 0, 1, 1], [], []>} : vector<1x32xf32>, vector<32x128xf32>, vector<1x128xf32> -> vector<1x128xf32>
    %63 = arith.addf %61, %62 : vector<1x128xf32>
    %64 = arith.mulf %63, %3 : vector<1x128xf32>
    %65 = math.tanh %64 : vector<1x128xf32>
    %66 = arith.mulf %65, %3 : vector<1x128xf32>
    %67 = arith.addf %66, %4 : vector<1x128xf32>
    %68 = vector.extract_strided_slice %67 {offsets = [0, 0], sizes = [1, 32], strides = [1, 1]} : vector<1x128xf32> to vector<1x32xf32>
    %69 = vector.extract_strided_slice %67 {offsets = [0, 32], sizes = [1, 32], strides = [1, 1]} : vector<1x128xf32> to vector<1x32xf32>
    %70 = vector.extract_strided_slice %67 {offsets = [0, 64], sizes = [1, 32], strides = [1, 1]} : vector<1x128xf32> to vector<1x32xf32>
    %71 = vector.extract_strided_slice %67 {offsets = [0, 96], sizes = [1, 32], strides = [1, 1]} : vector<1x128xf32> to vector<1x32xf32>
    %72 = arith.mulf %69, %58 : vector<1x32xf32>
    %73 = arith.mulf %68, %70 : vector<1x32xf32>
    %74 = arith.addf %72, %73 : vector<1x32xf32>
    %75 = math.tanh %74 : vector<1x32xf32>
    %76 = arith.mulf %71, %75 : vector<1x32xf32>
    %77 = vector.extract_strided_slice %10 {offsets = [4, 0], sizes = [1, 128], strides = [1, 1]} : vector<8x128xf32> to vector<1x128xf32>
    %cst_12 = arith.constant dense<0.000000e+00> : vector<1x128xf32>
    %78 = tpu.matmul %76, %0, %cst_12 {dimension_numbers = #tpu.dot_dimension_numbers<[1], [0], [0], [1], [0, 0, 1, 1], [], []>} : vector<1x32xf32>, vector<32x128xf32>, vector<1x128xf32> -> vector<1x128xf32>
    %79 = arith.addf %77, %78 : vector<1x128xf32>
    %80 = arith.mulf %79, %3 : vector<1x128xf32>
    %81 = math.tanh %80 : vector<1x128xf32>
    %82 = arith.mulf %81, %3 : vector<1x128xf32>
    %83 = arith.addf %82, %4 : vector<1x128xf32>
    %84 = vector.extract_strided_slice %83 {offsets = [0, 0], sizes = [1, 32], strides = [1, 1]} : vector<1x128xf32> to vector<1x32xf32>
    %85 = vector.extract_strided_slice %83 {offsets = [0, 32], sizes = [1, 32], strides = [1, 1]} : vector<1x128xf32> to vector<1x32xf32>
    %86 = vector.extract_strided_slice %83 {offsets = [0, 64], sizes = [1, 32], strides = [1, 1]} : vector<1x128xf32> to vector<1x32xf32>
    %87 = vector.extract_strided_slice %83 {offsets = [0, 96], sizes = [1, 32], strides = [1, 1]} : vector<1x128xf32> to vector<1x32xf32>
    %88 = arith.mulf %85, %74 : vector<1x32xf32>
    %89 = arith.mulf %84, %86 : vector<1x32xf32>
    %90 = arith.addf %88, %89 : vector<1x32xf32>
    %91 = math.tanh %90 : vector<1x32xf32>
    %92 = arith.mulf %87, %91 : vector<1x32xf32>
    %93 = vector.extract_strided_slice %10 {offsets = [5, 0], sizes = [1, 128], strides = [1, 1]} : vector<8x128xf32> to vector<1x128xf32>
    %cst_13 = arith.constant dense<0.000000e+00> : vector<1x128xf32>
    %94 = tpu.matmul %92, %0, %cst_13 {dimension_numbers = #tpu.dot_dimension_numbers<[1], [0], [0], [1], [0, 0, 1, 1], [], []>} : vector<1x32xf32>, vector<32x128xf32>, vector<1x128xf32> -> vector<1x128xf32>
    %95 = arith.addf %93, %94 : vector<1x128xf32>
    %96 = arith.mulf %95, %3 : vector<1x128xf32>
    %97 = math.tanh %96 : vector<1x128xf32>
    %98 = arith.mulf %97, %3 : vector<1x128xf32>
    %99 = arith.addf %98, %4 : vector<1x128xf32>
    %100 = vector.extract_strided_slice %99 {offsets = [0, 0], sizes = [1, 32], strides = [1, 1]} : vector<1x128xf32> to vector<1x32xf32>
    %101 = vector.extract_strided_slice %99 {offsets = [0, 32], sizes = [1, 32], strides = [1, 1]} : vector<1x128xf32> to vector<1x32xf32>
    %102 = vector.extract_strided_slice %99 {offsets = [0, 64], sizes = [1, 32], strides = [1, 1]} : vector<1x128xf32> to vector<1x32xf32>
    %103 = vector.extract_strided_slice %99 {offsets = [0, 96], sizes = [1, 32], strides = [1, 1]} : vector<1x128xf32> to vector<1x32xf32>
    %104 = arith.mulf %101, %90 : vector<1x32xf32>
    %105 = arith.mulf %100, %102 : vector<1x32xf32>
    %106 = arith.addf %104, %105 : vector<1x32xf32>
    %107 = math.tanh %106 : vector<1x32xf32>
    %108 = arith.mulf %103, %107 : vector<1x32xf32>
    %109 = vector.extract_strided_slice %10 {offsets = [6, 0], sizes = [1, 128], strides = [1, 1]} : vector<8x128xf32> to vector<1x128xf32>
    %cst_14 = arith.constant dense<0.000000e+00> : vector<1x128xf32>
    %110 = tpu.matmul %108, %0, %cst_14 {dimension_numbers = #tpu.dot_dimension_numbers<[1], [0], [0], [1], [0, 0, 1, 1], [], []>} : vector<1x32xf32>, vector<32x128xf32>, vector<1x128xf32> -> vector<1x128xf32>
    %111 = arith.addf %109, %110 : vector<1x128xf32>
    %112 = arith.mulf %111, %3 : vector<1x128xf32>
    %113 = math.tanh %112 : vector<1x128xf32>
    %114 = arith.mulf %113, %3 : vector<1x128xf32>
    %115 = arith.addf %114, %4 : vector<1x128xf32>
    %116 = vector.extract_strided_slice %115 {offsets = [0, 0], sizes = [1, 32], strides = [1, 1]} : vector<1x128xf32> to vector<1x32xf32>
    %117 = vector.extract_strided_slice %115 {offsets = [0, 32], sizes = [1, 32], strides = [1, 1]} : vector<1x128xf32> to vector<1x32xf32>
    %118 = vector.extract_strided_slice %115 {offsets = [0, 64], sizes = [1, 32], strides = [1, 1]} : vector<1x128xf32> to vector<1x32xf32>
    %119 = vector.extract_strided_slice %115 {offsets = [0, 96], sizes = [1, 32], strides = [1, 1]} : vector<1x128xf32> to vector<1x32xf32>
    %120 = arith.mulf %117, %106 : vector<1x32xf32>
    %121 = arith.mulf %116, %118 : vector<1x32xf32>
    %122 = arith.addf %120, %121 : vector<1x32xf32>
    %123 = math.tanh %122 : vector<1x32xf32>
    %124 = arith.mulf %119, %123 : vector<1x32xf32>
    %125 = vector.extract_strided_slice %10 {offsets = [7, 0], sizes = [1, 128], strides = [1, 1]} : vector<8x128xf32> to vector<1x128xf32>
    %cst_15 = arith.constant dense<0.000000e+00> : vector<1x128xf32>
    %126 = tpu.matmul %124, %0, %cst_15 {dimension_numbers = #tpu.dot_dimension_numbers<[1], [0], [0], [1], [0, 0, 1, 1], [], []>} : vector<1x32xf32>, vector<32x128xf32>, vector<1x128xf32> -> vector<1x128xf32>
    %127 = arith.addf %125, %126 : vector<1x128xf32>
    %128 = arith.mulf %127, %3 : vector<1x128xf32>
    %129 = math.tanh %128 : vector<1x128xf32>
    %130 = arith.mulf %129, %3 : vector<1x128xf32>
    %131 = arith.addf %130, %4 : vector<1x128xf32>
    %132 = vector.extract_strided_slice %131 {offsets = [0, 0], sizes = [1, 32], strides = [1, 1]} : vector<1x128xf32> to vector<1x32xf32>
    %133 = vector.extract_strided_slice %131 {offsets = [0, 32], sizes = [1, 32], strides = [1, 1]} : vector<1x128xf32> to vector<1x32xf32>
    %134 = vector.extract_strided_slice %131 {offsets = [0, 64], sizes = [1, 32], strides = [1, 1]} : vector<1x128xf32> to vector<1x32xf32>
    %135 = vector.extract_strided_slice %131 {offsets = [0, 96], sizes = [1, 32], strides = [1, 1]} : vector<1x128xf32> to vector<1x32xf32>
    %136 = arith.mulf %133, %122 : vector<1x32xf32>
    %137 = arith.mulf %132, %134 : vector<1x32xf32>
    %138 = arith.addf %136, %137 : vector<1x32xf32>
    %139 = math.tanh %138 : vector<1x32xf32>
    %140 = arith.mulf %135, %139 : vector<1x32xf32>
    %c34 = arith.constant 34 : index
    %c0_16 = arith.constant 0 : index
    %141 = vector.load %arg1[%c34, %c0_16] : memref<40x128xf32, #tpu.memory_space<vmem>>, vector<1x32xf32>
    %c35 = arith.constant 35 : index
    %c0_17 = arith.constant 0 : index
    %142 = vector.load %arg1[%c35, %c0_17] : memref<40x128xf32, #tpu.memory_space<vmem>>, vector<1x1xf32>
    %143 = arith.mulf %140, %141 : vector<1x32xf32>
    %cst_18 = arith.constant dense<0.000000e+00> : vector<1xf32>
    %144 = vector.multi_reduction <add>, %143, %cst_18 [1] : vector<1x32xf32> to vector<1xf32>
    %145 = vector.shape_cast %144 : vector<1xf32> to vector<1x1xf32>
    %146 = arith.addf %145, %142 : vector<1x1xf32>
    %c0_19 = arith.constant 0 : index
    %c0_20 = arith.constant 0 : index
    %147 = vector.load %arg2[%c0_19, %c0_20] : memref<1x1xf32, #tpu.memory_space<vmem>>, vector<1x1xf32>
    tpu.vector_store %arg2[%c0_19, %c0_20], %146 {strides = array<i32>} : memref<1x1xf32, #tpu.memory_space<vmem>>, vector<1x1xf32>,
    return
  }
}

</mosaic_0001>

<llo_original>
// kernel: lstm_forward.1
$region0: #{lstm_forward.1}
  #allocation0 [shape = 'u32[]', space=smem, size = 0x4, offset = 0x4, fixed_abs, tag = 'smem constant byte address 0x4 - core index']
  #allocation1 [shape = 'u32[144,128]{1,0:T(1,128)}', space=vmem, size = 0x12000, scoped, tag = 'internal scratch']
  %s0 = inlined_call_operand.vmem [shape: f32[8,1], index: 0, kind: input, shape index: {}]
  %s1 = inlined_call_operand.hbm [shape: f32[40,128], index: 1, kind: input, shape index: {}]
  %s2 = inlined_call_operand.hbm [shape: f32[1,1], index: 2, kind: output, shape index: {}]
  %s3 = sld [smem:[#allocation0]]
  $region22: #{lstm_forward.1} parent=0
    _
  %s5 = ssub.s32 1, %s3
  %s6 = scalar_select 0, %s5, %s3
  $region1: #{lstm_forward.1} parent=0
    #allocation2 [shape = 'u8[20480]{0}', space=vmem, size = 0x5000, scoped, tag = 'input window, operand 1, single buffered']
    #allocation3 [shape = 's32[1]{0}', space=sflag, size = 0x4, scoped, tag = 'scoped memory for lstm_forward.1']
    #allocation4 [shape = 's32[1]{0}', space=sflag, size = 0x4, scoped, tag = 'scoped memory for lstm_forward.1']
    #allocation5 [shape = 'u8[512]{0}', space=vmem, size = 0x400, scoped, tag = 'output window, operand 0, single buffered']
    %7 = vsyncpa [#allocation3], 0
    %8 = vsyncpa [#allocation4], 0
    // Predicated region
    $region2: #{lstm_forward.1} parent=1 // pred_check
      _
    $region3: #{lstm_forward.1} parent=1 // pred_check_branch
      %10 = sbr.rel (0) target = $region5
    $region4: #{lstm_forward.1} parent=1 // pred_region
      _
    $region5: #{lstm_forward.1} parent=1 // pred_fallthru
      _
    // Predicated region
    $region6: #{lstm_forward.1} parent=1 // pred_check
      _
    $region7: #{lstm_forward.1} parent=1 // pred_check_branch
      %12 = sbr.rel (0) target = $region9
    $region8: #{lstm_forward.1} parent=1 // pred_region
      %s14 = ssub.s32 640, 640
      %15 = vsyncadd [#allocation3], %s14
      %s16 = sshll.u32 [#allocation2], 4
      %s17 = int_to_ptr.vmem [resolvable:$true] %s16
      %22 = dma.hbm_to_vmem [thread:$0]  %s1, 640, %s17, [#allocation3], 128, 128, 8
    $region9: #{lstm_forward.1} parent=1 // pred_fallthru
      _
    // Predicated region
    $region10: #{lstm_forward.1} parent=1 // pred_check
      _
    $region11: #{lstm_forward.1} parent=1 // pred_check_branch
      %24 = sbr.rel (0) target = $region13
    $region12: #{lstm_forward.1} parent=1 // pred_region
      %25 = dma.done [#allocation3], 640
    $region13: #{lstm_forward.1} parent=1 // pred_fallthru
      _
    %v26 = vld [vmem:[#allocation2] sm:$0xff]
    %v27 = vld [vmem:[#allocation2 + $0x8] sm:$0xff]
    %v28 = vld [vmem:[#allocation2 + $0x10] sm:$0xff]
    %v29 = vld [vmem:[#allocation2 + $0x18] sm:$0xff]
    %v30 = vld [vmem:[#allocation2 + $0x20] sm:$0x1]
    %v31 = vld [vmem:[#allocation2 + $0x21] sm:$0x1]
    %v32 = vld [vmem:[#allocation2 + $0x24] sm:$0x1]
    %v33 = vld [vmem:[#allocation2 + $0x25] sm:$0x1]
    %v34 = vld [vmem:[%s0] sm:$0xff]
    %36 = vset.pattern.permute.xlu0 0
    %37 = vperm.xlu0 %36, %v34
    %v38 = vpop.permute.xlu0 %37
    %v40 = vlaneseq
    %v41 = vshrl.u32 %v40, 7
    %v42 = vsub.s32 0, %v41
    %v43 = vrot.slane %v30, %v42
    %v44 = vmul.f32 %v38, %v43
    %v45 = vlaneseq
    %v46 = vshrl.u32 %v45, 7
    %v47 = vsub.s32 0, %v46
    %v48 = vrot.slane %v31, %v47
    %v49 = vadd.f32 %v44, %v48
    %vm50 = vcmask 261120
    %v52 = vsel %vm50, 0.0, 0
    %54 = vmatprep.subr.mxu0 0.0
    %55 = vmatpush1.msra.mxu0 %v26
    %56 = vmatprep.subr.mxu0 0.0
    %57 = vmatpush1.msra.mxu0 %v27
    %58 = vmatprep.subr.mxu0 0.0
    %59 = vmatpush1.msra.mxu0 %v28
    %60 = vmatprep.subr.mxu0 0.0
    %61 = vmatpush1.msra.mxu0 %v29
    %62 = vmatprep.subr.mxu0 0.0
    %63 = vmatpush1.msra.mxu0 0.0
    %64 = vmatprep.subr.mxu0 0.0
    %65 = vmatpush1.msra.mxu0 0.0
    %66 = vmatprep.subr.mxu0 0.0
    %67 = vmatpush1.msra.mxu0 0.0
    %68 = vmatprep.subr.mxu0 0.0
    %69 = vmatpush1.msra.mxu0 0.0
    %70 = vmatprep.subr.mxu0 0.0
    %71 = vmatpush1.msra.mxu0 0.0
    %72 = vmatprep.subr.mxu0 0.0
    %73 = vmatpush1.msra.mxu0 0.0
    %74 = vmatprep.subr.mxu0 0.0
    %75 = vmatpush1.msra.mxu0 0.0
    %76 = vmatprep.subr.mxu0 0.0
    %77 = vmatpush1.msra.mxu0 0.0
    %78 = vmatprep.subr.mxu0 0.0
    %79 = vmatpush1.msra.mxu0 0.0
    %80 = vmatprep.subr.mxu0 0.0
    %81 = vmatpush1.msra.mxu0 0.0
    %82 = vmatprep.subr.mxu0 0.0
    %83 = vmatpush1.msra.mxu0 0.0
    %84 = vmatprep.subr.mxu0 0.0
    %85 = vmatpush1.msra.mxu0 0.0
    %86 = vmatprep.subr.mxu0 0.0
    %87 = vmatpush1.msra.mxu0 0.0
    %88 = vmatprep.subr.mxu0 0.0
    %89 = vmatpush1.msra.mxu0 0.0
    %90 = vmatprep.subr.mxu0 0.0
    %91 = vmatpush1.msra.mxu0 0.0
    %92 = vmatprep.subr.mxu0 0.0
    %93 = vmatpush1.msra.mxu0 0.0
    %94 = vmatprep.subr.mxu0 0.0
    %95 = vmatpush1.msra.mxu0 0.0
    %96 = vmatprep.subr.mxu0 0.0
    %97 = vmatpush1.msra.mxu0 0.0
    %98 = vmatprep.subr.mxu0 0.0
    %99 = vmatpush1.msra.mxu0 0.0
    %100 = vmatprep.subr.mxu0 0.0
    %101 = vmatpush1.msra.mxu0 0.0
    %102 = vmatprep.subr.mxu0 0.0
    %103 = vmatpush1.msra.mxu0 0.0
    %104 = vmatprep.subr.mxu0 0.0
    %105 = vmatpush1.msra.mxu0 0.0
    %106 = vmatprep.subr.mxu0 0.0
    %107 = vmatpush1.msra.mxu0 0.0
    %108 = vmatprep.subr.mxu0 0.0
    %109 = vmatpush1.msra.mxu0 0.0
    %110 = vmatprep.subr.mxu0 0.0
    %111 = vmatpush1.msra.mxu0 0.0
    %112 = vmatprep.subr.mxu0 0.0
    %113 = vmatpush1.msra.mxu0 0.0
    %114 = vmatprep.subr.mxu0 0.0
    %115 = vmatpush1.msra.mxu0 0.0
    %116 = vmatprep.subr.mxu0 0.0
    %117 = vmatpush1.msra.mxu0 0.0
    %118 = vmatprep.mubr.f32.mxu0 0.0
    %119 = vmatmul.mubr.f32.gmra.mrb[0].mxu0 %v52
    %v120 = vpop.f32.mrb[0].mxu0
    %v121 = vadd.f32 0.0, %v120
    %v122 = vpop.f32.mrb[0].mxu0
    %123 = vdwg.mxu0
    %v124 = vadd.f32 %v49, %v121
    %v125 = vmul.f32 %v124, %v32
    %v126 = vtanh.pop %v125
    %v127 = vmul.f32 %v126, %v32
    %v128 = vadd.f32 %v127, %v33
    %v129 = vmul.f32 %v128, 0.0
    %131 = vrot.lane.b32.xlu0 %v128, 64
    %v132 = vpop.permute.xlu0 %131
    %v134 = vmul.f32 %v128, %v132
    %136 = vrot.lane.b32.xlu0 %v134, 32
    %v137 = vpop.permute.xlu0 %136
    %v139 = vadd.f32 %v129, %v137
    %v140 = vtanh.pop %v139
    %142 = vrot.lane.b32.xlu0 %v140, 64
    %v143 = vpop.permute.xlu0 %142
    %v145 = vmul.f32 %v128, %v143
    %147 = vrot.lane.b32.xlu0 %v145, 32
    %v148 = vpop.permute.xlu0 %147
    %v149 = vsel %vm50, %v148, 0
    %151 = vmatprep.subr.mxu0 0.0
    %152 = vmatpush1.msra.mxu0 %v26
    %153 = vmatprep.subr.mxu0 0.0
    %154 = vmatpush1.msra.mxu0 %v27
    %155 = vmatprep.subr.mxu0 0.0
    %156 = vmatpush1.msra.mxu0 %v28
    %157 = vmatprep.subr.mxu0 0.0
    %158 = vmatpush1.msra.mxu0 %v29
    %159 = vmatprep.subr.mxu0 0.0
    %160 = vmatpush1.msra.mxu0 0.0
    %161 = vmatprep.subr.mxu0 0.0
    %162 = vmatpush1.msra.mxu0 0.0
    %163 = vmatprep.subr.mxu0 0.0
    %164 = vmatpush1.msra.mxu0 0.0
    %165 = vmatprep.subr.mxu0 0.0
    %166 = vmatpush1.msra.mxu0 0.0
    %167 = vmatprep.subr.mxu0 0.0
    %168 = vmatpush1.msra.mxu0 0.0
    %169 = vmatprep.subr.mxu0 0.0
    %170 = vmatpush1.msra.mxu0 0.0
    %171 = vmatprep.subr.mxu0 0.0
    %172 = vmatpush1.msra.mxu0 0.0
    %173 = vmatprep.subr.mxu0 0.0
    %174 = vmatpush1.msra.mxu0 0.0
    %175 = vmatprep.subr.mxu0 0.0
    %176 = vmatpush1.msra.mxu0 0.0
    %177 = vmatprep.subr.mxu0 0.0
    %178 = vmatpush1.msra.mxu0 0.0
    %179 = vmatprep.subr.mxu0 0.0
    %180 = vmatpush1.msra.mxu0 0.0
    %181 = vmatprep.subr.mxu0 0.0
    %182 = vmatpush1.msra.mxu0 0.0
    %183 = vmatprep.subr.mxu0 0.0
    %184 = vmatpush1.msra.mxu0 0.0
    %185 = vmatprep.subr.mxu0 0.0
    %186 = vmatpush1.msra.mxu0 0.0
    %187 = vmatprep.subr.mxu0 0.0
    %188 = vmatpush1.msra.mxu0 0.0
    %189 = vmatprep.subr.mxu0 0.0
    %190 = vmatpush1.msra.mxu0 0.0
    %191 = vmatprep.subr.mxu0 0.0
    %192 = vmatpush1.msra.mxu0 0.0
    %193 = vmatprep.subr.mxu0 0.0
    %194 = vmatpush1.msra.mxu0 0.0
    %195 = vmatprep.subr.mxu0 0.0
    %196 = vmatpush1.msra.mxu0 0.0
    %197 = vmatprep.subr.mxu0 0.0
    %198 = vmatpush1.msra.mxu0 0.0
    %199 = vmatprep.subr.mxu0 0.0
    %200 = vmatpush1.msra.mxu0 0.0
    %201 = vmatprep.subr.mxu0 0.0
    %202 = vmatpush1.msra.mxu0 0.0
    %203 = vmatprep.subr.mxu0 0.0
    %204 = vmatpush1.msra.mxu0 0.0
    %205 = vmatprep.subr.mxu0 0.0
    %206 = vmatpush1.msra.mxu0 0.0
    %207 = vmatprep.subr.mxu0 0.0
    %208 = vmatpush1.msra.mxu0 0.0
    %209 = vmatprep.subr.mxu0 0.0
    %210 = vmatpush1.msra.mxu0 0.0
    %211 = vmatprep.subr.mxu0 0.0
    %212 = vmatpush1.msra.mxu0 0.0
    %213 = vmatprep.subr.mxu0 0.0
    %214 = vmatpush1.msra.mxu0 0.0
    %215 = vmatprep.mubr.f32.mxu0 0.0
    %216 = vmatmul.mubr.f32.gmra.mrb[0].mxu0 %v149
    %v217 = vpop.f32.mrb[0].mxu0
    %v218 = vadd.f32 0.0, %v217
    %v219 = vpop.f32.mrb[0].mxu0
    %220 = vdwg.mxu0
    %v222 = vrot.slane %v218, 7
    %v224 = vadd.f32 %v49, %v222
    %v226 = vrot.slane %v32, 7
    %v228 = vmul.f32 %v224, %v226
    %v229 = vtanh.pop %v228
    %v230 = vmul.f32 %v229, %v226
    %v232 = vrot.slane %v33, 7
    %v234 = vadd.f32 %v230, %v232
    %v236 = vrot.slane %v139, 7
    %v238 = vmul.f32 %v234, %v236
    %240 = vrot.lane.b32.xlu0 %v234, 64
    %v241 = vpop.permute.xlu0 %240
    %v243 = vmul.f32 %v234, %v241
    %245 = vrot.lane.b32.xlu0 %v243, 32
    %v246 = vpop.permute.xlu0 %245
    %v248 = vadd.f32 %v238, %v246
    %v249 = vtanh.pop %v248
    %251 = vrot.lane.b32.xlu0 %v249, 64
    %v252 = vpop.permute.xlu0 %251
    %v254 = vmul.f32 %v234, %v252
    %v256 = vrot.slane %v254, 1
    %257 = vrot.lane.b32.xlu0 %v256, 32
    %v258 = vpop.permute.xlu0 %257
    %v259 = vsel %vm50, %v258, 0
    %261 = vmatprep.subr.mxu0 0.0
    %262 = vmatpush1.msra.mxu0 %v26
    %263 = vmatprep.subr.mxu0 0.0
    %264 = vmatpush1.msra.mxu0 %v27
    %265 = vmatprep.subr.mxu0 0.0
    %266 = vmatpush1.msra.mxu0 %v28
    %267 = vmatprep.subr.mxu0 0.0
    %268 = vmatpush1.msra.mxu0 %v29
    %269 = vmatprep.subr.mxu0 0.0
    %270 = vmatpush1.msra.mxu0 0.0
    %271 = vmatprep.subr.mxu0 0.0
    %272 = vmatpush1.msra.mxu0 0.0
    %273 = vmatprep.subr.mxu0 0.0
    %274 = vmatpush1.msra.mxu0 0.0
    %275 = vmatprep.subr.mxu0 0.0
    %276 = vmatpush1.msra.mxu0 0.0
    %277 = vmatprep.subr.mxu0 0.0
    %278 = vmatpush1.msra.mxu0 0.0
    %279 = vmatprep.subr.mxu0 0.0
    %280 = vmatpush1.msra.mxu0 0.0
    %281 = vmatprep.subr.mxu0 0.0
    %282 = vmatpush1.msra.mxu0 0.0
    %283 = vmatprep.subr.mxu0 0.0
    %284 = vmatpush1.msra.mxu0 0.0
    %285 = vmatprep.subr.mxu0 0.0
    %286 = vmatpush1.msra.mxu0 0.0
    %287 = vmatprep.subr.mxu0 0.0
    %288 = vmatpush1.msra.mxu0 0.0
    %289 = vmatprep.subr.mxu0 0.0
    %290 = vmatpush1.msra.mxu0 0.0
    %291 = vmatprep.subr.mxu0 0.0
    %292 = vmatpush1.msra.mxu0 0.0
    %293 = vmatprep.subr.mxu0 0.0
    %294 = vmatpush1.msra.mxu0 0.0
    %295 = vmatprep.subr.mxu0 0.0
    %296 = vmatpush1.msra.mxu0 0.0
    %297 = vmatprep.subr.mxu0 0.0
    %298 = vmatpush1.msra.mxu0 0.0
    %299 = vmatprep.subr.mxu0 0.0
    %300 = vmatpush1.msra.mxu0 0.0
    %301 = vmatprep.subr.mxu0 0.0
    %302 = vmatpush1.msra.mxu0 0.0
    %303 = vmatprep.subr.mxu0 0.0
    %304 = vmatpush1.msra.mxu0 0.0
    %305 = vmatprep.subr.mxu0 0.0
    %306 = vmatpush1.msra.mxu0 0.0
    %307 = vmatprep.subr.mxu0 0.0
    %308 = vmatpush1.msra.mxu0 0.0
    %309 = vmatprep.subr.mxu0 0.0
    %310 = vmatpush1.msra.mxu0 0.0
    %311 = vmatprep.subr.mxu0 0.0
    %312 = vmatpush1.msra.mxu0 0.0
    %313 = vmatprep.subr.mxu0 0.0
    %314 = vmatpush1.msra.mxu0 0.0
    %315 = vmatprep.subr.mxu0 0.0
    %316 = vmatpush1.msra.mxu0 0.0
    %317 = vmatprep.subr.mxu0 0.0
    %318 = vmatpush1.msra.mxu0 0.0
    %319 = vmatprep.subr.mxu0 0.0
    %320 = vmatpush1.msra.mxu0 0.0
    %321 = vmatprep.subr.mxu0 0.0
    %322 = vmatpush1.msra.mxu0 0.0
    %323 = vmatprep.subr.mxu0 0.0
    %324 = vmatpush1.msra.mxu0 0.0
    %325 = vmatprep.mubr.f32.mxu0 0.0
    %326 = vmatmul.mubr.f32.gmra.mrb[0].mxu0 %v259
    %v327 = vpop.f32.mrb[0].mxu0
    %v328 = vadd.f32 0.0, %v327
    %v329 = vpop.f32.mrb[0].mxu0
    %330 = vdwg.mxu0
    %v332 = vrot.slane %v328, 6
    %v334 = vadd.f32 %v49, %v332
    %v335 = vrot.slane %v32, 6
    %v337 = vmul.f32 %v334, %v335
    %v338 = vtanh.pop %v337
    %v339 = vmul.f32 %v338, %v335
    %v340 = vrot.slane %v33, 6
    %v342 = vadd.f32 %v339, %v340
    %v344 = vrot.slane %v248, 7
    %v346 = vmul.f32 %v342, %v344
    %348 = vrot.lane.b32.xlu0 %v342, 64
    %v349 = vpop.permute.xlu0 %348
    %v351 = vmul.f32 %v342, %v349
    %353 = vrot.lane.b32.xlu0 %v351, 32
    %v354 = vpop.permute.xlu0 %353
    %v356 = vadd.f32 %v346, %v354
    %v357 = vtanh.pop %v356
    %359 = vrot.lane.b32.xlu0 %v357, 64
    %v360 = vpop.permute.xlu0 %359
    %v362 = vmul.f32 %v342, %v360
    %v364 = vrot.slane %v362, 2
    %365 = vrot.lane.b32.xlu0 %v364, 32
    %v366 = vpop.permute.xlu0 %365
    %v367 = vsel %vm50, %v366, 0
    %369 = vmatprep.subr.mxu0 0.0
    %370 = vmatpush1.msra.mxu0 %v26
    %371 = vmatprep.subr.mxu0 0.0
    %372 = vmatpush1.msra.mxu0 %v27
    %373 = vmatprep.subr.mxu0 0.0
    %374 = vmatpush1.msra.mxu0 %v28
    %375 = vmatprep.subr.mxu0 0.0
    %376 = vmatpush1.msra.mxu0 %v29
    %377 = vmatprep.subr.mxu0 0.0
    %378 = vmatpush1.msra.mxu0 0.0
    %379 = vmatprep.subr.mxu0 0.0
    %380 = vmatpush1.msra.mxu0 0.0
    %381 = vmatprep.subr.mxu0 0.0
    %382 = vmatpush1.msra.mxu0 0.0
    %383 = vmatprep.subr.mxu0 0.0
    %384 = vmatpush1.msra.mxu0 0.0
    %385 = vmatprep.subr.mxu0 0.0
    %386 = vmatpush1.msra.mxu0 0.0
    %387 = vmatprep.subr.mxu0 0.0
    %388 = vmatpush1.msra.mxu0 0.0
    %389 = vmatprep.subr.mxu0 0.0
    %390 = vmatpush1.msra.mxu0 0.0
    %391 = vmatprep.subr.mxu0 0.0
    %392 = vmatpush1.msra.mxu0 0.0
    %393 = vmatprep.subr.mxu0 0.0
    %394 = vmatpush1.msra.mxu0 0.0
    %395 = vmatprep.subr.mxu0 0.0
    %396 = vmatpush1.msra.mxu0 0.0
    %397 = vmatprep.subr.mxu0 0.0
    %398 = vmatpush1.msra.mxu0 0.0
    %399 = vmatprep.subr.mxu0 0.0
    %400 = vmatpush1.msra.mxu0 0.0
    %401 = vmatprep.subr.mxu0 0.0
    %402 = vmatpush1.msra.mxu0 0.0
    %403 = vmatprep.subr.mxu0 0.0
    %404 = vmatpush1.msra.mxu0 0.0
    %405 = vmatprep.subr.mxu0 0.0
    %406 = vmatpush1.msra.mxu0 0.0
    %407 = vmatprep.subr.mxu0 0.0
    %408 = vmatpush1.msra.mxu0 0.0
    %409 = vmatprep.subr.mxu0 0.0
    %410 = vmatpush1.msra.mxu0 0.0
    %411 = vmatprep.subr.mxu0 0.0
    %412 = vmatpush1.msra.mxu0 0.0
    %413 = vmatprep.subr.mxu0 0.0
    %414 = vmatpush1.msra.mxu0 0.0
    %415 = vmatprep.subr.mxu0 0.0
    %416 = vmatpush1.msra.mxu0 0.0
    %417 = vmatprep.subr.mxu0 0.0
    %418 = vmatpush1.msra.mxu0 0.0
    %419 = vmatprep.subr.mxu0 0.0
    %420 = vmatpush1.msra.mxu0 0.0
    %421 = vmatprep.subr.mxu0 0.0
    %422 = vmatpush1.msra.mxu0 0.0
    %423 = vmatprep.subr.mxu0 0.0
    %424 = vmatpush1.msra.mxu0 0.0
    %425 = vmatprep.subr.mxu0 0.0
    %426 = vmatpush1.msra.mxu0 0.0
    %427 = vmatprep.subr.mxu0 0.0
    %428 = vmatpush1.msra.mxu0 0.0
    %429 = vmatprep.subr.mxu0 0.0
    %430 = vmatpush1.msra.mxu0 0.0
    %431 = vmatprep.subr.mxu0 0.0
    %432 = vmatpush1.msra.mxu0 0.0
    %433 = vmatprep.mubr.f32.mxu0 0.0
    %434 = vmatmul.mubr.f32.gmra.mrb[0].mxu0 %v367
    %v435 = vpop.f32.mrb[0].mxu0
    %v436 = vadd.f32 0.0, %v435
    %v437 = vpop.f32.mrb[0].mxu0
    %438 = vdwg.mxu0
    %v440 = vrot.slane %v436, 5
    %v442 = vadd.f32 %v49, %v440
    %v443 = vrot.slane %v32, 5
    %v445 = vmul.f32 %v442, %v443
    %v446 = vtanh.pop %v445
    %v447 = vmul.f32 %v446, %v443
    %v448 = vrot.slane %v33, 5
    %v450 = vadd.f32 %v447, %v448
    %v452 = vrot.slane %v356, 7
    %v454 = vmul.f32 %v450, %v452
    %456 = vrot.lane.b32.xlu0 %v450, 64
    %v457 = vpop.permute.xlu0 %456
    %v459 = vmul.f32 %v450, %v457
    %461 = vrot.lane.b32.xlu0 %v459, 32
    %v462 = vpop.permute.xlu0 %461
    %v464 = vadd.f32 %v454, %v462
    %v465 = vtanh.pop %v464
    %467 = vrot.lane.b32.xlu0 %v465, 64
    %v468 = vpop.permute.xlu0 %467
    %v470 = vmul.f32 %v450, %v468
    %v472 = vrot.slane %v470, 3
    %473 = vrot.lane.b32.xlu0 %v472, 32
    %v474 = vpop.permute.xlu0 %473
    %v475 = vsel %vm50, %v474, 0
    %477 = vmatprep.subr.mxu0 0.0
    %478 = vmatpush1.msra.mxu0 %v26
    %479 = vmatprep.subr.mxu0 0.0
    %480 = vmatpush1.msra.mxu0 %v27
    %481 = vmatprep.subr.mxu0 0.0
    %482 = vmatpush1.msra.mxu0 %v28
    %483 = vmatprep.subr.mxu0 0.0
    %484 = vmatpush1.msra.mxu0 %v29
    %485 = vmatprep.subr.mxu0 0.0
    %486 = vmatpush1.msra.mxu0 0.0
    %487 = vmatprep.subr.mxu0 0.0
    %488 = vmatpush1.msra.mxu0 0.0
    %489 = vmatprep.subr.mxu0 0.0
    %490 = vmatpush1.msra.mxu0 0.0
    %491 = vmatprep.subr.mxu0 0.0
    %492 = vmatpush1.msra.mxu0 0.0
    %493 = vmatprep.subr.mxu0 0.0
    %494 = vmatpush1.msra.mxu0 0.0
    %495 = vmatprep.subr.mxu0 0.0
    %496 = vmatpush1.msra.mxu0 0.0
    %497 = vmatprep.subr.mxu0 0.0
    %498 = vmatpush1.msra.mxu0 0.0
    %499 = vmatprep.subr.mxu0 0.0
    %500 = vmatpush1.msra.mxu0 0.0
    %501 = vmatprep.subr.mxu0 0.0
    %502 = vmatpush1.msra.mxu0 0.0
    %503 = vmatprep.subr.mxu0 0.0
    %504 = vmatpush1.msra.mxu0 0.0
    %505 = vmatprep.subr.mxu0 0.0
    %506 = vmatpush1.msra.mxu0 0.0
    %507 = vmatprep.subr.mxu0 0.0
    %508 = vmatpush1.msra.mxu0 0.0
    %509 = vmatprep.subr.mxu0 0.0
    %510 = vmatpush1.msra.mxu0 0.0
    %511 = vmatprep.subr.mxu0 0.0
    %512 = vmatpush1.msra.mxu0 0.0
    %513 = vmatprep.subr.mxu0 0.0
    %514 = vmatpush1.msra.mxu0 0.0
    %515 = vmatprep.subr.mxu0 0.0
    %516 = vmatpush1.msra.mxu0 0.0
    %517 = vmatprep.subr.mxu0 0.0
    %518 = vmatpush1.msra.mxu0 0.0
    %519 = vmatprep.subr.mxu0 0.0
    %520 = vmatpush1.msra.mxu0 0.0
    %521 = vmatprep.subr.mxu0 0.0
    %522 = vmatpush1.msra.mxu0 0.0
    %523 = vmatprep.subr.mxu0 0.0
    %524 = vmatpush1.msra.mxu0 0.0
    %525 = vmatprep.subr.mxu0 0.0
    %526 = vmatpush1.msra.mxu0 0.0
    %527 = vmatprep.subr.mxu0 0.0
    %528 = vmatpush1.msra.mxu0 0.0
    %529 = vmatprep.subr.mxu0 0.0
    %530 = vmatpush1.msra.mxu0 0.0
    %531 = vmatprep.subr.mxu0 0.0
    %532 = vmatpush1.msra.mxu0 0.0
    %533 = vmatprep.subr.mxu0 0.0
    %534 = vmatpush1.msra.mxu0 0.0
    %535 = vmatprep.subr.mxu0 0.0
    %536 = vmatpush1.msra.mxu0 0.0
    %537 = vmatprep.subr.mxu0 0.0
    %538 = vmatpush1.msra.mxu0 0.0
    %539 = vmatprep.subr.mxu0 0.0
    %540 = vmatpush1.msra.mxu0 0.0
    %541 = vmatprep.mubr.f32.mxu0 0.0
    %542 = vmatmul.mubr.f32.gmra.mrb[0].mxu0 %v475
    %v543 = vpop.f32.mrb[0].mxu0
    %v544 = vadd.f32 0.0, %v543
    %v545 = vpop.f32.mrb[0].mxu0
    %546 = vdwg.mxu0
    %v548 = vrot.slane %v544, 4
    %v550 = vadd.f32 %v49, %v548
    %v551 = vrot.slane %v32, 4
    %v553 = vmul.f32 %v550, %v551
    %v554 = vtanh.pop %v553
    %v555 = vmul.f32 %v554, %v551
    %v556 = vrot.slane %v33, 4
    %v558 = vadd.f32 %v555, %v556
    %v560 = vrot.slane %v464, 7
    %v562 = vmul.f32 %v558, %v560
    %564 = vrot.lane.b32.xlu0 %v558, 64
    %v565 = vpop.permute.xlu0 %564
    %v567 = vmul.f32 %v558, %v565
    %569 = vrot.lane.b32.xlu0 %v567, 32
    %v570 = vpop.permute.xlu0 %569
    %v572 = vadd.f32 %v562, %v570
    %v573 = vtanh.pop %v572
    %575 = vrot.lane.b32.xlu0 %v573, 64
    %v576 = vpop.permute.xlu0 %575
    %v578 = vmul.f32 %v558, %v576
    %v580 = vrot.slane %v578, 4
    %581 = vrot.lane.b32.xlu0 %v580, 32
    %v582 = vpop.permute.xlu0 %581
    %v583 = vsel %vm50, %v582, 0
    %585 = vmatprep.subr.mxu0 0.0
    %586 = vmatpush1.msra.mxu0 %v26
    %587 = vmatprep.subr.mxu0 0.0
    %588 = vmatpush1.msra.mxu0 %v27
    %589 = vmatprep.subr.mxu0 0.0
    %590 = vmatpush1.msra.mxu0 %v28
    %591 = vmatprep.subr.mxu0 0.0
    %592 = vmatpush1.msra.mxu0 %v29
    %593 = vmatprep.subr.mxu0 0.0
    %594 = vmatpush1.msra.mxu0 0.0
    %595 = vmatprep.subr.mxu0 0.0
    %596 = vmatpush1.msra.mxu0 0.0
    %597 = vmatprep.subr.mxu0 0.0
    %598 = vmatpush1.msra.mxu0 0.0
    %599 = vmatprep.subr.mxu0 0.0
    %600 = vmatpush1.msra.mxu0 0.0
    %601 = vmatprep.subr.mxu0 0.0
    %602 = vmatpush1.msra.mxu0 0.0
    %603 = vmatprep.subr.mxu0 0.0
    %604 = vmatpush1.msra.mxu0 0.0
    %605 = vmatprep.subr.mxu0 0.0
    %606 = vmatpush1.msra.mxu0 0.0
    %607 = vmatprep.subr.mxu0 0.0
    %608 = vmatpush1.msra.mxu0 0.0
    %609 = vmatprep.subr.mxu0 0.0
    %610 = vmatpush1.msra.mxu0 0.0
    %611 = vmatprep.subr.mxu0 0.0
    %612 = vmatpush1.msra.mxu0 0.0
    %613 = vmatprep.subr.mxu0 0.0
    %614 = vmatpush1.msra.mxu0 0.0
    %615 = vmatprep.subr.mxu0 0.0
    %616 = vmatpush1.msra.mxu0 0.0
    %617 = vmatprep.subr.mxu0 0.0
    %618 = vmatpush1.msra.mxu0 0.0
    %619 = vmatprep.subr.mxu0 0.0
    %620 = vmatpush1.msra.mxu0 0.0
    %621 = vmatprep.subr.mxu0 0.0
    %622 = vmatpush1.msra.mxu0 0.0
    %623 = vmatprep.subr.mxu0 0.0
    %624 = vmatpush1.msra.mxu0 0.0
    %625 = vmatprep.subr.mxu0 0.0
    %626 = vmatpush1.msra.mxu0 0.0
    %627 = vmatprep.subr.mxu0 0.0
    %628 = vmatpush1.msra.mxu0 0.0
    %629 = vmatprep.subr.mxu0 0.0
    %630 = vmatpush1.msra.mxu0 0.0
    %631 = vmatprep.subr.mxu0 0.0
    %632 = vmatpush1.msra.mxu0 0.0
    %633 = vmatprep.subr.mxu0 0.0
    %634 = vmatpush1.msra.mxu0 0.0
    %635 = vmatprep.subr.mxu0 0.0
    %636 = vmatpush1.msra.mxu0 0.0
    %637 = vmatprep.subr.mxu0 0.0
    %638 = vmatpush1.msra.mxu0 0.0
    %639 = vmatprep.subr.mxu0 0.0
    %640 = vmatpush1.msra.mxu0 0.0
    %641 = vmatprep.subr.mxu0 0.0
    %642 = vmatpush1.msra.mxu0 0.0
    %643 = vmatprep.subr.mxu0 0.0
    %644 = vmatpush1.msra.mxu0 0.0
    %645 = vmatprep.subr.mxu0 0.0
    %646 = vmatpush1.msra.mxu0 0.0
    %647 = vmatprep.subr.mxu0 0.0
    %648 = vmatpush1.msra.mxu0 0.0
    %649 = vmatprep.mubr.f32.mxu0 0.0
    %650 = vmatmul.mubr.f32.gmra.mrb[0].mxu0 %v583
    %v651 = vpop.f32.mrb[0].mxu0
    %v652 = vadd.f32 0.0, %v651
    %v653 = vpop.f32.mrb[0].mxu0
    %654 = vdwg.mxu0
    %v656 = vrot.slane %v652, 3
    %v658 = vadd.f32 %v49, %v656
    %v659 = vrot.slane %v32, 3
    %v661 = vmul.f32 %v658, %v659
    %v662 = vtanh.pop %v661
    %v663 = vmul.f32 %v662, %v659
    %v664 = vrot.slane %v33, 3
    %v666 = vadd.f32 %v663, %v664
    %v668 = vrot.slane %v572, 7
    %v670 = vmul.f32 %v666, %v668
    %672 = vrot.lane.b32.xlu0 %v666, 64
    %v673 = vpop.permute.xlu0 %672
    %v675 = vmul.f32 %v666, %v673
    %677 = vrot.lane.b32.xlu0 %v675, 32
    %v678 = vpop.permute.xlu0 %677
    %v680 = vadd.f32 %v670, %v678
    %v681 = vtanh.pop %v680
    %683 = vrot.lane.b32.xlu0 %v681, 64
    %v684 = vpop.permute.xlu0 %683
    %v686 = vmul.f32 %v666, %v684
    %v688 = vrot.slane %v686, 5
    %689 = vrot.lane.b32.xlu0 %v688, 32
    %v690 = vpop.permute.xlu0 %689
    %v691 = vsel %vm50, %v690, 0
    %693 = vmatprep.subr.mxu0 0.0
    %694 = vmatpush1.msra.mxu0 %v26
    %695 = vmatprep.subr.mxu0 0.0
    %696 = vmatpush1.msra.mxu0 %v27
    %697 = vmatprep.subr.mxu0 0.0
    %698 = vmatpush1.msra.mxu0 %v28
    %699 = vmatprep.subr.mxu0 0.0
    %700 = vmatpush1.msra.mxu0 %v29
    %701 = vmatprep.subr.mxu0 0.0
    %702 = vmatpush1.msra.mxu0 0.0
    %703 = vmatprep.subr.mxu0 0.0
    %704 = vmatpush1.msra.mxu0 0.0
    %705 = vmatprep.subr.mxu0 0.0
    %706 = vmatpush1.msra.mxu0 0.0
    %707 = vmatprep.subr.mxu0 0.0
    %708 = vmatpush1.msra.mxu0 0.0
    %709 = vmatprep.subr.mxu0 0.0
    %710 = vmatpush1.msra.mxu0 0.0
    %711 = vmatprep.subr.mxu0 0.0
    %712 = vmatpush1.msra.mxu0 0.0
    %713 = vmatprep.subr.mxu0 0.0
    %714 = vmatpush1.msra.mxu0 0.0
    %715 = vmatprep.subr.mxu0 0.0
    %716 = vmatpush1.msra.mxu0 0.0
    %717 = vmatprep.subr.mxu0 0.0
    %718 = vmatpush1.msra.mxu0 0.0
    %719 = vmatprep.subr.mxu0 0.0
    %720 = vmatpush1.msra.mxu0 0.0
    %721 = vmatprep.subr.mxu0 0.0
    %722 = vmatpush1.msra.mxu0 0.0
    %723 = vmatprep.subr.mxu0 0.0
    %724 = vmatpush1.msra.mxu0 0.0
    %725 = vmatprep.subr.mxu0 0.0
    %726 = vmatpush1.msra.mxu0 0.0
    %727 = vmatprep.subr.mxu0 0.0
    %728 = vmatpush1.msra.mxu0 0.0
    %729 = vmatprep.subr.mxu0 0.0
    %730 = vmatpush1.msra.mxu0 0.0
    %731 = vmatprep.subr.mxu0 0.0
    %732 = vmatpush1.msra.mxu0 0.0
    %733 = vmatprep.subr.mxu0 0.0
    %734 = vmatpush1.msra.mxu0 0.0
    %735 = vmatprep.subr.mxu0 0.0
    %736 = vmatpush1.msra.mxu0 0.0
    %737 = vmatprep.subr.mxu0 0.0
    %738 = vmatpush1.msra.mxu0 0.0
    %739 = vmatprep.subr.mxu0 0.0
    %740 = vmatpush1.msra.mxu0 0.0
    %741 = vmatprep.subr.mxu0 0.0
    %742 = vmatpush1.msra.mxu0 0.0
    %743 = vmatprep.subr.mxu0 0.0
    %744 = vmatpush1.msra.mxu0 0.0
    %745 = vmatprep.subr.mxu0 0.0
    %746 = vmatpush1.msra.mxu0 0.0
    %747 = vmatprep.subr.mxu0 0.0
    %748 = vmatpush1.msra.mxu0 0.0
    %749 = vmatprep.subr.mxu0 0.0
    %750 = vmatpush1.msra.mxu0 0.0
    %751 = vmatprep.subr.mxu0 0.0
    %752 = vmatpush1.msra.mxu0 0.0
    %753 = vmatprep.subr.mxu0 0.0
    %754 = vmatpush1.msra.mxu0 0.0
    %755 = vmatprep.subr.mxu0 0.0
    %756 = vmatpush1.msra.mxu0 0.0
    %757 = vmatprep.mubr.f32.mxu0 0.0
    %758 = vmatmul.mubr.f32.gmra.mrb[0].mxu0 %v691
    %v759 = vpop.f32.mrb[0].mxu0
    %v760 = vadd.f32 0.0, %v759
    %v761 = vpop.f32.mrb[0].mxu0
    %762 = vdwg.mxu0
    %v764 = vrot.slane %v760, 2
    %v766 = vadd.f32 %v49, %v764
    %v767 = vrot.slane %v32, 2
    %v769 = vmul.f32 %v766, %v767
    %v770 = vtanh.pop %v769
    %v771 = vmul.f32 %v770, %v767
    %v772 = vrot.slane %v33, 2
    %v774 = vadd.f32 %v771, %v772
    %v776 = vrot.slane %v680, 7
    %v778 = vmul.f32 %v774, %v776
    %780 = vrot.lane.b32.xlu0 %v774, 64
    %v781 = vpop.permute.xlu0 %780
    %v783 = vmul.f32 %v774, %v781
    %785 = vrot.lane.b32.xlu0 %v783, 32
    %v786 = vpop.permute.xlu0 %785
    %v788 = vadd.f32 %v778, %v786
    %v789 = vtanh.pop %v788
    %791 = vrot.lane.b32.xlu0 %v789, 64
    %v792 = vpop.permute.xlu0 %791
    %v794 = vmul.f32 %v774, %v792
    %v796 = vrot.slane %v794, 6
    %797 = vrot.lane.b32.xlu0 %v796, 32
    %v798 = vpop.permute.xlu0 %797
    %v799 = vsel %vm50, %v798, 0
    %801 = vmatprep.subr.mxu0 0.0
    %802 = vmatpush1.msra.mxu0 %v26
    %803 = vmatprep.subr.mxu0 0.0
    %804 = vmatpush1.msra.mxu0 %v27
    %805 = vmatprep.subr.mxu0 0.0
    %806 = vmatpush1.msra.mxu0 %v28
    %807 = vmatprep.subr.mxu0 0.0
    %808 = vmatpush1.msra.mxu0 %v29
    %809 = vmatprep.subr.mxu0 0.0
    %810 = vmatpush1.msra.mxu0 0.0
    %811 = vmatprep.subr.mxu0 0.0
    %812 = vmatpush1.msra.mxu0 0.0
    %813 = vmatprep.subr.mxu0 0.0
    %814 = vmatpush1.msra.mxu0 0.0
    %815 = vmatprep.subr.mxu0 0.0
    %816 = vmatpush1.msra.mxu0 0.0
    %817 = vmatprep.subr.mxu0 0.0
    %818 = vmatpush1.msra.mxu0 0.0
    %819 = vmatprep.subr.mxu0 0.0
    %820 = vmatpush1.msra.mxu0 0.0
    %821 = vmatprep.subr.mxu0 0.0
    %822 = vmatpush1.msra.mxu0 0.0
    %823 = vmatprep.subr.mxu0 0.0
    %824 = vmatpush1.msra.mxu0 0.0
    %825 = vmatprep.subr.mxu0 0.0
    %826 = vmatpush1.msra.mxu0 0.0
    %827 = vmatprep.subr.mxu0 0.0
    %828 = vmatpush1.msra.mxu0 0.0
    %829 = vmatprep.subr.mxu0 0.0
    %830 = vmatpush1.msra.mxu0 0.0
    %831 = vmatprep.subr.mxu0 0.0
    %832 = vmatpush1.msra.mxu0 0.0
    %833 = vmatprep.subr.mxu0 0.0
    %834 = vmatpush1.msra.mxu0 0.0
    %835 = vmatprep.subr.mxu0 0.0
    %836 = vmatpush1.msra.mxu0 0.0
    %837 = vmatprep.subr.mxu0 0.0
    %838 = vmatpush1.msra.mxu0 0.0
    %839 = vmatprep.subr.mxu0 0.0
    %840 = vmatpush1.msra.mxu0 0.0
    %841 = vmatprep.subr.mxu0 0.0
    %842 = vmatpush1.msra.mxu0 0.0
    %843 = vmatprep.subr.mxu0 0.0
    %844 = vmatpush1.msra.mxu0 0.0
    %845 = vmatprep.subr.mxu0 0.0
    %846 = vmatpush1.msra.mxu0 0.0
    %847 = vmatprep.subr.mxu0 0.0
    %848 = vmatpush1.msra.mxu0 0.0
    %849 = vmatprep.subr.mxu0 0.0
    %850 = vmatpush1.msra.mxu0 0.0
    %851 = vmatprep.subr.mxu0 0.0
    %852 = vmatpush1.msra.mxu0 0.0
    %853 = vmatprep.subr.mxu0 0.0
    %854 = vmatpush1.msra.mxu0 0.0
    %855 = vmatprep.subr.mxu0 0.0
    %856 = vmatpush1.msra.mxu0 0.0
    %857 = vmatprep.subr.mxu0 0.0
    %858 = vmatpush1.msra.mxu0 0.0
    %859 = vmatprep.subr.mxu0 0.0
    %860 = vmatpush1.msra.mxu0 0.0
    %861 = vmatprep.subr.mxu0 0.0
    %862 = vmatpush1.msra.mxu0 0.0
    %863 = vmatprep.subr.mxu0 0.0
    %864 = vmatpush1.msra.mxu0 0.0
    %865 = vmatprep.mubr.f32.mxu0 0.0
    %866 = vmatmul.mubr.f32.gmra.mrb[0].mxu0 %v799
    %v867 = vpop.f32.mrb[0].mxu0
    %v868 = vadd.f32 0.0, %v867
    %v869 = vpop.f32.mrb[0].mxu0
    %870 = vdwg.mxu0
    %v872 = vrot.slane %v868, 1
    %v874 = vadd.f32 %v49, %v872
    %v875 = vrot.slane %v32, 1
    %v877 = vmul.f32 %v874, %v875
    %v878 = vtanh.pop %v877
    %v879 = vmul.f32 %v878, %v875
    %v880 = vrot.slane %v33, 1
    %v882 = vadd.f32 %v879, %v880
    %v884 = vrot.slane %v788, 7
    %v886 = vmul.f32 %v882, %v884
    %888 = vrot.lane.b32.xlu0 %v882, 64
    %v889 = vpop.permute.xlu0 %888
    %v891 = vmul.f32 %v882, %v889
    %893 = vrot.lane.b32.xlu0 %v891, 32
    %v894 = vpop.permute.xlu0 %893
    %v896 = vadd.f32 %v886, %v894
    %v897 = vtanh.pop %v896
    %899 = vrot.lane.b32.xlu0 %v897, 64
    %v900 = vpop.permute.xlu0 %899
    %v902 = vmul.f32 %v882, %v900
    %v903 = vld [vmem:[#allocation2 + $0x22] sm:$0x1]
    %v904 = vld [vmem:[#allocation2 + $0x23] sm:$0x1]
    %v906 = vrot.slane %v903, 1
    %907 = vrot.lane.b32.xlu0 %v906, 96
    %v908 = vpop.permute.xlu0 %907
    %v910 = vmul.f32 %v902, %v908
    %912 = vrot.lane.b32.xlu0 %v910, 32
    %v913 = vpop.permute.xlu0 %912
    %vm915 = vcmask 261127
    %v916 = vsel %vm915, %v913, 0.0
    %917 = vadd.xlane.f32.xlu0 %v916
    %v918 = vpop.xlane.xlu0 %917
    %v920 = vrot.slane %v904, 1
    %v922 = vadd.f32 %v918, %v920
    %vm923 = vcmask 7175
    %924 = vst.msk [vmem:[#allocation5 - $0x7] sm:$0x80] %vm923, %v922
    // Predicated region
    $region14: #{lstm_forward.1} parent=1 // pred_check
      _
    $region15: #{lstm_forward.1} parent=1 // pred_check_branch
      %926 = sbr.rel (0) target = $region17
    $region16: #{lstm_forward.1} parent=1 // pred_region
      %s928 = ssub.s32 16, 16
      %929 = vsyncadd [#allocation4], %s928
      %s931 = sshll.u32 [#allocation5], 4
      %s932 = int_to_ptr.vmem [resolvable:$true] %s931
      %934 = dma.vmem_to_hbm [thread:$0]  %s932, 16, %s2, [#allocation4]
    $region17: #{lstm_forward.1} parent=1 // pred_fallthru
      _
    // Predicated region
    $region18: #{lstm_forward.1} parent=1 // pred_check
      _
    $region19: #{lstm_forward.1} parent=1 // pred_check_branch
      %936 = sbr.rel (0) target = $region21
    $region20: #{lstm_forward.1} parent=1 // pred_region
      %937 = dma.done [#allocation4], 16
    $region21: #{lstm_forward.1} parent=1 // pred_fallthru
      _
    %938 = vsyncpa [#allocation3], 1
    %939 = vsyncpa [#allocation4], 1

</llo_original>
